<compile_context>
chip_gen: v7x
topology: tpu7x:2x2x1
jax: 0.10.0
libtpu: 0.0.40
codegen_flags: <defaults>
</compile_context>

<pallas_src>
import jax
import jax.numpy as jnp
from jax.experimental import pallas as pl
from jax.experimental.pallas import tpu as pltpu


def _code2vec_kernel(s_ref, p_ref, e_ref, ws_ref, wp_ref, we_ref,
                     a_ref, bias_ref, out_ref):
    # s/p/e_ref: (TB, Lp, E) bf16   ws/wp/we_ref: (E, Cp) bf16
    # a_ref: (1, 1, Cp) f32         bias_ref: (1, Lp, 1) f32 (0 real / -1e30 pad)
    # out_ref: (TB, Cp) f32
    TB, Lp, E = s_ref.shape
    Cp = out_ref.shape[1]

    # Leading-dim collapse (layout-free: Lp is a multiple of the bf16 sublane
    # tile) -> one big-M matmul per embedding slab, accumulated in f32.
    s2 = s_ref[...].reshape(TB * Lp, E)
    p2 = p_ref[...].reshape(TB * Lp, E)
    e2 = e_ref[...].reshape(TB * Lp, E)
    acc = jnp.dot(s2, ws_ref[...], preferred_element_type=jnp.float32)
    acc = acc + jnp.dot(p2, wp_ref[...], preferred_element_type=jnp.float32)
    acc = acc + jnp.dot(e2, we_ref[...], preferred_element_type=jnp.float32)

    h = jnp.tanh(acc).reshape(TB, Lp, Cp)                       # (TB, Lp, Cp) f32

    # Attention logits: VPU mul + lane (XLU) reduce — keeps the MXU free.
    logits = jnp.sum(h * a_ref[...], axis=-1, keepdims=True)    # (TB, Lp, 1)
    logits = logits + bias_ref[...]                             # mask L-padding

    # Numerically stable softmax over the context axis.
    m = jnp.max(logits, axis=1, keepdims=True)                  # (TB, 1, 1)
    p = jnp.exp(logits - m)                                     # (TB, Lp, 1)
    attn = p * pl.reciprocal(jnp.sum(p, axis=1, keepdims=True), approx=True)

    # Attention-weighted reduction over contexts -> code vectors.
    out_ref[...] = jnp.sum(h * attn, axis=1)                    # (TB, Cp)


def code2vec_encoder_forward(starts, paths, ends, masks, params, *, block_b=8):
    """Forward pass matching the PyTorch Code2VecEncoder (eval mode).

    starts/paths/ends: int32 [B, L]; masks is accepted but (like the PyTorch
    forward) unused. Returns f32 [B, C] code vectors.
    """
    del masks  # the reference forward does not use masks
    node_emb = params["node_embedding"]          # (nodes_dim, E) f32
    path_emb = params["path_embedding"]          # (paths_dim, E) f32
    fc_w = params["fc_weight"]                   # (C, 3E) f32 (torch layout)
    a = params["a"]                              # (C, 1) f32

    B, L = starts.shape
    E = node_emb.shape[1]
    C = fc_w.shape[0]

    # Embedding gathers stay in XLA; matmul operands are narrowed to bf16.
    starts_e = node_emb[starts].astype(jnp.bfloat16)   # (B, L, E)
    paths_e = path_emb[paths].astype(jnp.bfloat16)     # (B, L, E)
    ends_e = node_emb[ends].astype(jnp.bfloat16)       # (B, L, E)

    # Padding: batch -> multiple of TB, contexts -> multiple of 16 (bf16 sublane
    # tile, keeps the in-kernel reshape layout-free), C -> multiple of 128
    # (lane-dense output stores). Padded W/a columns are zero so padded output
    # columns are exactly zero and sliced away.
    TB = block_b
    Bp = ((B + TB - 1) // TB) * TB
    Lp = ((L + 15) // 16) * 16
    Cp = ((C + 127) // 128) * 128

    def pad_ctx(x):
        return jnp.pad(x, ((0, Bp - B), (0, Lp - L), (0, 0)))

    starts_e = pad_ctx(starts_e)
    paths_e = pad_ctx(paths_e)
    ends_e = pad_ctx(ends_e)

    w_t = jnp.pad(fc_w.T.astype(jnp.bfloat16), ((0, 0), (0, Cp - C)))  # (3E, Cp)
    ws, wp, we = w_t[:E], w_t[E:2 * E], w_t[2 * E:]

    a_row = jnp.pad(a.reshape(1, 1, C).astype(jnp.float32),
                    ((0, 0), (0, 0), (0, Cp - C)))                     # (1, 1, Cp)

    # Additive bias that masks ONLY the context padding we introduced (the
    # reference attends to all L given contexts).
    bias = jnp.where(jnp.arange(Lp) < L, 0.0, -1e30).astype(jnp.float32)
    bias = bias.reshape(1, Lp, 1)

    out = pl.pallas_call(
        _code2vec_kernel,
        out_shape=jax.ShapeDtypeStruct((Bp, Cp), jnp.float32),
        grid_spec=pltpu.PrefetchScalarGridSpec(
            num_scalar_prefetch=0,
            grid=(Bp // TB,),
            in_specs=[
                pl.BlockSpec((TB, Lp, E), lambda b: (b, 0, 0)),
                pl.BlockSpec((TB, Lp, E), lambda b: (b, 0, 0)),
                pl.BlockSpec((TB, Lp, E), lambda b: (b, 0, 0)),
                pl.BlockSpec((E, Cp), lambda b: (0, 0)),
                pl.BlockSpec((E, Cp), lambda b: (0, 0)),
                pl.BlockSpec((E, Cp), lambda b: (0, 0)),
                pl.BlockSpec((1, 1, Cp), lambda b: (0, 0, 0)),
                pl.BlockSpec((1, Lp, 1), lambda b: (0, 0, 0)),
            ],
            out_specs=pl.BlockSpec((TB, Cp), lambda b: (b, 0)),
        ),
        compiler_params=pltpu.CompilerParams(
            dimension_semantics=("parallel",)),
    )(starts_e, paths_e, ends_e, ws, wp, we, a_row, bias)

    return out[:B, :C]


def init_params(key, nodes_dim, paths_dim, embedding_dim, code_vector_size):
    k1, k2, k3, k4 = jax.random.split(key, 4)
    # nn.Embedding default init: N(0, 1)
    node_embedding = jax.random.normal(k1, (nodes_dim, embedding_dim), jnp.float32)
    path_embedding = jax.random.normal(k2, (paths_dim, embedding_dim), jnp.float32)
    # nn.Linear default init: U(-1/sqrt(fan_in), 1/sqrt(fan_in)), torch layout (C, 3E).
    fan_in = 3 * embedding_dim
    bound = 1.0 / jnp.sqrt(jnp.float32(fan_in))
    fc_weight = jax.random.uniform(
        k3, (code_vector_size, 3 * embedding_dim), jnp.float32, -bound, bound)
    # a: torch.nn.init.uniform_ default -> U(0, 1), shape (C, 1)
    a = jax.random.uniform(k4, (code_vector_size, 1), jnp.float32, 0.0, 1.0)
    return {
        "node_embedding": node_embedding,
        "path_embedding": path_embedding,
        "fc_weight": fc_weight,
        "a": a,
    }


def _reference_forward(starts, paths, ends, params):
    # Pure-JAX f32 reference (dropout is identity in eval mode).
    node_emb = params["node_embedding"]
    path_emb = params["path_embedding"]
    ctx = jnp.concatenate(
        [node_emb[starts], path_emb[paths], node_emb[ends]], axis=2)
    h = jnp.tanh(jnp.einsum("bld,cd->blc", ctx, params["fc_weight"]))
    logits = jnp.einsum("blc,co->blo", h, params["a"])
    attn = jax.nn.softmax(logits, axis=1)
    return jnp.sum(h * attn, axis=1)


if __name__ == "__main__":
    # Small, deterministic example shapes.
    nodes_dim = 64
    paths_dim = 96
    embedding_dim = 32
    code_vector_size = 32
    batch = 2
    max_contexts = 8

    key = jax.random.PRNGKey(0)
    kp, ks, kq, ke = jax.random.split(key, 4)
    params = init_params(kp, nodes_dim, paths_dim, embedding_dim, code_vector_size)

    starts = jax.random.randint(ks, (batch, max_contexts), 0, nodes_dim, jnp.int32)
    paths = jax.random.randint(kq, (batch, max_contexts), 0, paths_dim, jnp.int32)
    ends = jax.random.randint(ke, (batch, max_contexts), 0, nodes_dim, jnp.int32)
    masks = jnp.ones((batch, max_contexts), jnp.float32)  # unused by forward

    out = code2vec_encoder_forward(starts, paths, ends, masks, params)
    out = jax.block_until_ready(out)

    ref = _reference_forward(starts, paths, ends, params)
    assert out.shape == (batch, code_vector_size)
    # bf16 matmul operands + approx reciprocal -> loosened tolerance vs f32 ref.
    max_err = float(jnp.max(jnp.abs(out - ref)))
    assert max_err < 5e-2, f"max abs err {max_err}"
    print("KERNEL_OK")
</pallas_src>

<mosaic_0001>
module attributes {stable_mosaic.version = 11 : i64} {
  func.func @_code2vec_kernel(%arg0: i32, %arg1: memref<8x16x32xbf16, #tpu.memory_space<vmem>>, %arg2: memref<8x16x32xbf16, #tpu.memory_space<vmem>>, %arg3: memref<8x16x32xbf16, #tpu.memory_space<vmem>>, %arg4: memref<32x128xbf16, #tpu.memory_space<vmem>>, %arg5: memref<32x128xbf16, #tpu.memory_space<vmem>>, %arg6: memref<32x128xbf16, #tpu.memory_space<vmem>>, %arg7: memref<1x1x128xf32, #tpu.memory_space<vmem>>, %arg8: memref<1x16x1xf32, #tpu.memory_space<vmem>>, %arg9: memref<8x128xf32, #tpu.memory_space<vmem>>) attributes {dimension_semantics = [#tpu.dimension_semantics<parallel>], iteration_bounds = array<i64: 1>, scalar_prefetch = 0 : i64, scratch_operands = 0 : i64, tpu.core_type = #tpu.core_type<tc>, window_params = [{transform_indices = @transform_0, window_bounds = array<i64: 8, 16, 32>}, {transform_indices = @transform_1, window_bounds = array<i64: 8, 16, 32>}, {transform_indices = @transform_2, window_bounds = array<i64: 8, 16, 32>}, {pipeline_mode = #tpu.pipeline_mode<synchronous>, transform_indices = @transform_3, window_bounds = array<i64: 32, 128>}, {pipeline_mode = #tpu.pipeline_mode<synchronous>, transform_indices = @transform_4, window_bounds = array<i64: 32, 128>}, {pipeline_mode = #tpu.pipeline_mode<synchronous>, transform_indices = @transform_5, window_bounds = array<i64: 32, 128>}, {pipeline_mode = #tpu.pipeline_mode<synchronous>, transform_indices = @transform_6, window_bounds = array<i64: 1, 1, 128>}, {pipeline_mode = #tpu.pipeline_mode<synchronous>, transform_indices = @transform_7, window_bounds = array<i64: 1, 16, 1>}, {transform_indices = @transform_8, window_bounds = array<i64: 8, 128>}]} {
    %c0 = arith.constant 0 : index
    %c0_0 = arith.constant 0 : index
    %c0_1 = arith.constant 0 : index
    %0 = vector.load %arg1[%c0, %c0_0, %c0_1] : memref<8x16x32xbf16, #tpu.memory_space<vmem>>, vector<8x16x32xbf16>
    %1 = vector.shape_cast %0 : vector<8x16x32xbf16> to vector<128x32xbf16>
    %c0_2 = arith.constant 0 : index
    %c0_3 = arith.constant 0 : index
    %c0_4 = arith.constant 0 : index
    %2 = vector.load %arg2[%c0_2, %c0_3, %c0_4] : memref<8x16x32xbf16, #tpu.memory_space<vmem>>, vector<8x16x32xbf16>
    %3 = vector.shape_cast %2 : vector<8x16x32xbf16> to vector<128x32xbf16>
    %c0_5 = arith.constant 0 : index
    %c0_6 = arith.constant 0 : index
    %c0_7 = arith.constant 0 : index
    %4 = vector.load %arg3[%c0_5, %c0_6, %c0_7] : memref<8x16x32xbf16, #tpu.memory_space<vmem>>, vector<8x16x32xbf16>
    %5 = vector.shape_cast %4 : vector<8x16x32xbf16> to vector<128x32xbf16>
    %c0_8 = arith.constant 0 : index
    %c0_9 = arith.constant 0 : index
    %6 = vector.load %arg4[%c0_8, %c0_9] : memref<32x128xbf16, #tpu.memory_space<vmem>>, vector<32x128xbf16>
    %cst = arith.constant dense<0.000000e+00> : vector<128x128xf32>
    %7 = tpu.matmul %1, %6, %cst {dimension_numbers = #tpu.dot_dimension_numbers<[1], [0], [0], [1], [0, 0, 1, 1], [], []>} : vector<128x32xbf16>, vector<32x128xbf16>, vector<128x128xf32> -> vector<128x128xf32>
    %c0_10 = arith.constant 0 : index
    %c0_11 = arith.constant 0 : index
    %8 = vector.load %arg5[%c0_10, %c0_11] : memref<32x128xbf16, #tpu.memory_space<vmem>>, vector<32x128xbf16>
    %cst_12 = arith.constant dense<0.000000e+00> : vector<128x128xf32>
    %9 = tpu.matmul %3, %8, %cst_12 {dimension_numbers = #tpu.dot_dimension_numbers<[1], [0], [0], [1], [0, 0, 1, 1], [], []>} : vector<128x32xbf16>, vector<32x128xbf16>, vector<128x128xf32> -> vector<128x128xf32>
    %10 = arith.addf %7, %9 : vector<128x128xf32>
    %c0_13 = arith.constant 0 : index
    %c0_14 = arith.constant 0 : index
    %11 = vector.load %arg6[%c0_13, %c0_14] : memref<32x128xbf16, #tpu.memory_space<vmem>>, vector<32x128xbf16>
    %cst_15 = arith.constant dense<0.000000e+00> : vector<128x128xf32>
    %12 = tpu.matmul %5, %11, %cst_15 {dimension_numbers = #tpu.dot_dimension_numbers<[1], [0], [0], [1], [0, 0, 1, 1], [], []>} : vector<128x32xbf16>, vector<32x128xbf16>, vector<128x128xf32> -> vector<128x128xf32>
    %13 = arith.addf %10, %12 : vector<128x128xf32>
    %14 = math.tanh %13 : vector<128x128xf32>
    %15 = vector.shape_cast %14 : vector<128x128xf32> to vector<8x16x128xf32>
    %c0_16 = arith.constant 0 : index
    %c0_17 = arith.constant 0 : index
    %c0_18 = arith.constant 0 : index
    %16 = vector.load %arg7[%c0_16, %c0_17, %c0_18] : memref<1x1x128xf32, #tpu.memory_space<vmem>>, vector<1x1x128xf32>
    %17 = vector.broadcast %16 : vector<1x1x128xf32> to vector<8x16x128xf32>
    %18 = arith.mulf %15, %17 : vector<8x16x128xf32>
    %cst_19 = arith.constant dense<0.000000e+00> : vector<8x16xf32>
    %19 = vector.multi_reduction <add>, %18, %cst_19 [2] : vector<8x16x128xf32> to vector<8x16xf32>
    %20 = vector.shape_cast %19 : vector<8x16xf32> to vector<8x16x1xf32>
    %c0_20 = arith.constant 0 : index
    %c0_21 = arith.constant 0 : index
    %c0_22 = arith.constant 0 : index
    %21 = vector.load %arg8[%c0_20, %c0_21, %c0_22] : memref<1x16x1xf32, #tpu.memory_space<vmem>>, vector<1x16x1xf32>
    %22 = vector.broadcast %21 : vector<1x16x1xf32> to vector<8x16x1xf32>
    %23 = arith.addf %20, %22 : vector<8x16x1xf32>
    %cst_23 = arith.constant dense<0xFF800000> : vector<8x1xf32>
    %24 = vector.multi_reduction <maximumf>, %23, %cst_23 [1] : vector<8x16x1xf32> to vector<8x1xf32>
    %25 = vector.shape_cast %24 : vector<8x1xf32> to vector<8x1x1xf32>
    %26 = vector.broadcast %25 : vector<8x1x1xf32> to vector<8x16x1xf32>
    %27 = arith.subf %23, %26 : vector<8x16x1xf32>
    %28 = math.exp %27 : vector<8x16x1xf32>
    %cst_24 = arith.constant dense<0.000000e+00> : vector<8x1xf32>
    %29 = vector.multi_reduction <add>, %28, %cst_24 [1] : vector<8x16x1xf32> to vector<8x1xf32>
    %30 = vector.shape_cast %29 : vector<8x1xf32> to vector<8x1x1xf32>
    %31 = tpu.reciprocal %30 {approx = true} : vector<8x1x1xf32> -> vector<8x1x1xf32>
    %32 = vector.broadcast %31 : vector<8x1x1xf32> to vector<8x16x1xf32>
    %33 = arith.mulf %28, %32 : vector<8x16x1xf32>
    %34 = vector.broadcast %33 : vector<8x16x1xf32> to vector<8x16x128xf32>
    %35 = arith.mulf %15, %34 : vector<8x16x128xf32>
    %cst_25 = arith.constant dense<0.000000e+00> : vector<8x128xf32>
    %36 = vector.multi_reduction <add>, %35, %cst_25 [1] : vector<8x16x128xf32> to vector<8x128xf32>
    %c0_26 = arith.constant 0 : index
    %c0_27 = arith.constant 0 : index
    %37 = vector.load %arg9[%c0_26, %c0_27] : memref<8x128xf32, #tpu.memory_space<vmem>>, vector<8x128xf32>
    tpu.vector_store %arg9[%c0_26, %c0_27], %36 {strides = array<i32>} : memref<8x128xf32, #tpu.memory_space<vmem>>, vector<8x128xf32>,
    return
  }
  func.func @transform_0(%arg0: i32) -> (i32, i32, i32) {
    %c0_i32 = arith.constant 0 : i32
    %c0_i32_0 = arith.constant 0 : i32
    %c0_i32_1 = arith.constant 0 : i32
    return %arg0, %c0_i32, %c0_i32_0 : i32, i32, i32
  }
  func.func @transform_1(%arg0: i32) -> (i32, i32, i32) {
    %c0_i32 = arith.constant 0 : i32
    %c0_i32_0 = arith.constant 0 : i32
    %c0_i32_1 = arith.constant 0 : i32
    return %arg0, %c0_i32, %c0_i32_0 : i32, i32, i32
  }
  func.func @transform_2(%arg0: i32) -> (i32, i32, i32) {
    %c0_i32 = arith.constant 0 : i32
    %c0_i32_0 = arith.constant 0 : i32
    %c0_i32_1 = arith.constant 0 : i32
    return %arg0, %c0_i32, %c0_i32_0 : i32, i32, i32
  }
  func.func @transform_3(%arg0: i32) -> (i32, i32) {
    %c0_i32 = arith.constant 0 : i32
    %c0_i32_0 = arith.constant 0 : i32
    %c0_i32_1 = arith.constant 0 : i32
    return %c0_i32, %c0_i32_0 : i32, i32
  }
  func.func @transform_4(%arg0: i32) -> (i32, i32) {
    %c0_i32 = arith.constant 0 : i32
    %c0_i32_0 = arith.constant 0 : i32
    %c0_i32_1 = arith.constant 0 : i32
    return %c0_i32, %c0_i32_0 : i32, i32
  }
  func.func @transform_5(%arg0: i32) -> (i32, i32) {
    %c0_i32 = arith.constant 0 : i32
    %c0_i32_0 = arith.constant 0 : i32
    %c0_i32_1 = arith.constant 0 : i32
    return %c0_i32, %c0_i32_0 : i32, i32
  }
  func.func @transform_6(%arg0: i32) -> (i32, i32, i32) {
    %c0_i32 = arith.constant 0 : i32
    %c0_i32_0 = arith.constant 0 : i32
    %c0_i32_1 = arith.constant 0 : i32
    %c0_i32_2 = arith.constant 0 : i32
    return %c0_i32, %c0_i32_0, %c0_i32_1 : i32, i32, i32
  }
  func.func @transform_7(%arg0: i32) -> (i32, i32, i32) {
    %c0_i32 = arith.constant 0 : i32
    %c0_i32_0 = arith.constant 0 : i32
    %c0_i32_1 = arith.constant 0 : i32
    %c0_i32_2 = arith.constant 0 : i32
    return %c0_i32, %c0_i32_0, %c0_i32_1 : i32, i32, i32
  }
  func.func @transform_8(%arg0: i32) -> (i32, i32) {
    %c0_i32 = arith.constant 0 : i32
    %c0_i32_0 = arith.constant 0 : i32
    return %arg0, %c0_i32 : i32, i32
  }
}

</mosaic_0001>

<llo_original>
// kernel: tpu_custom_call.1
$region0: #{tpu_custom_call.1}
  #allocation0 [shape = 'u32[]', space=smem, size = 0x4, offset = 0x4, fixed_abs, tag = 'smem constant byte address 0x4 - core index']
  #allocation1 [shape = 'u32[144,128]{1,0:T(1,128)}', space=vmem, size = 0x12000, scoped, tag = 'internal scratch']
  %s0 = inlined_call_operand.hbm [shape: bf16[8,16,32], index: 0, kind: input, shape index: {}]
  %s1 = inlined_call_operand.hbm [shape: bf16[8,16,32], index: 1, kind: input, shape index: {}]
  %s2 = inlined_call_operand.hbm [shape: bf16[8,16,32], index: 2, kind: input, shape index: {}]
  %s3 = inlined_call_operand.vmem [shape: bf16[32,128], index: 3, kind: input, shape index: {}]
  %s4 = inlined_call_operand.vmem [shape: bf16[32,128], index: 4, kind: input, shape index: {}]
  %s5 = inlined_call_operand.hbm [shape: bf16[32,128], index: 5, kind: input, shape index: {}]
  %s6 = inlined_call_operand.vmem [shape: f32[1,1,128], index: 6, kind: input, shape index: {}]
  %s7 = inlined_call_operand.vmem [shape: f32[1,16,1], index: 7, kind: input, shape index: {}]
  %s8 = inlined_call_operand.hbm [shape: f32[8,128], index: 8, kind: output, shape index: {}]
  %s9 = sld [smem:[#allocation0]]
  $region58: #{tpu_custom_call.1} parent=0
    _
  %s11 = ssub.s32 1, %s9
  %s12 = scalar_select 0, %s11, %s9
  $region1: #{tpu_custom_call.1} parent=0
    #allocation2 [shape = 'u8[32768]{0}', space=vmem, size = 0x8000, scoped, tag = 'input window, operand 0, single buffered']
    #allocation3 [shape = 's32[1]{0}', space=sflag, size = 0x4, scoped, tag = 'scoped memory for tpu_custom_call.1']
    #allocation4 [shape = 's32[1]{0}', space=sflag, size = 0x4, scoped, tag = 'scoped memory for tpu_custom_call.1']
    #allocation5 [shape = 'u8[32768]{0}', space=vmem, size = 0x8000, scoped, tag = 'input window, operand 1, single buffered']
    #allocation6 [shape = 's32[1]{0}', space=sflag, size = 0x4, scoped, tag = 'scoped memory for tpu_custom_call.1']
    #allocation7 [shape = 'u8[32768]{0}', space=vmem, size = 0x8000, scoped, tag = 'input window, operand 2, single buffered']
    #allocation8 [shape = 'u8[8192]{0}', space=vmem, size = 0x2000, scoped, tag = 'input window, operand 5, single buffered']
    #allocation9 [shape = 's32[1]{0}', space=sflag, size = 0x4, scoped, tag = 'scoped memory for tpu_custom_call.1']
    #allocation10 [shape = 'u8[4096]{0}', space=vmem, size = 0x1000, scoped, tag = 'output window, operand 0, single buffered']
    %13 = vsyncpa [#allocation3], 0
    %14 = vsyncpa [#allocation6], 0
    %15 = vsyncpa [#allocation9], 0
    %16 = vsyncpa [#allocation4], 0
    // Predicated region
    $region2: #{tpu_custom_call.1} parent=1 // pred_check
      _
    $region3: #{tpu_custom_call.1} parent=1 // pred_check_branch
      %18 = sbr.rel (0) target = $region5
    $region4: #{tpu_custom_call.1} parent=1 // pred_region
      %s20 = ssub.s32 1024, 1024
      %21 = vsyncadd [#allocation3], %s20
      %s22 = sshll.u32 [#allocation2], 4
      %s23 = int_to_ptr.vmem [resolvable:$true] %s22
      %28 = dma.hbm_to_vmem [thread:$0]  %s0, 1024, %s23, [#allocation3], 64, 64, 4
    $region5: #{tpu_custom_call.1} parent=1 // pred_fallthru
      _
    // Predicated region
    $region6: #{tpu_custom_call.1} parent=1 // pred_check
      _
    $region7: #{tpu_custom_call.1} parent=1 // pred_check_branch
      %30 = sbr.rel (0) target = $region9
    $region8: #{tpu_custom_call.1} parent=1 // pred_region
      %s32 = ssub.s32 1024, 1024
      %33 = vsyncadd [#allocation6], %s32
      %s34 = sshll.u32 [#allocation5], 4
      %s35 = int_to_ptr.vmem [resolvable:$true] %s34
      %40 = dma.hbm_to_vmem [thread:$0]  %s1, 1024, %s35, [#allocation6], 64, 64, 4
    $region9: #{tpu_custom_call.1} parent=1 // pred_fallthru
      _
    // Predicated region
    $region10: #{tpu_custom_call.1} parent=1 // pred_check
      _
    $region11: #{tpu_custom_call.1} parent=1 // pred_check_branch
      %42 = sbr.rel (0) target = $region13
    $region12: #{tpu_custom_call.1} parent=1 // pred_region
      %s44 = ssub.s32 1024, 1024
      %45 = vsyncadd [#allocation6], %s44
      %s46 = sshll.u32 [#allocation7], 4
      %s47 = int_to_ptr.vmem [resolvable:$true] %s46
      %52 = dma.hbm_to_vmem [thread:$0]  %s2, 1024, %s47, [#allocation6], 64, 64, 4
    $region13: #{tpu_custom_call.1} parent=1 // pred_fallthru
      _
    // Predicated region
    $region14: #{tpu_custom_call.1} parent=1 // pred_check
      _
    $region15: #{tpu_custom_call.1} parent=1 // pred_check_branch
      %54 = sbr.rel (0) target = $region17
    $region16: #{tpu_custom_call.1} parent=1 // pred_region
      _
    $region17: #{tpu_custom_call.1} parent=1 // pred_fallthru
      _
    // Predicated region
    $region18: #{tpu_custom_call.1} parent=1 // pred_check
      _
    $region19: #{tpu_custom_call.1} parent=1 // pred_check_branch
      %56 = sbr.rel (0) target = $region21
    $region20: #{tpu_custom_call.1} parent=1 // pred_region
      _
    $region21: #{tpu_custom_call.1} parent=1 // pred_fallthru
      _
    // Predicated region
    $region22: #{tpu_custom_call.1} parent=1 // pred_check
      _
    $region23: #{tpu_custom_call.1} parent=1 // pred_check_branch
      %58 = sbr.rel (0) target = $region25
    $region24: #{tpu_custom_call.1} parent=1 // pred_region
      %s60 = ssub.s32 256, 256
      %61 = vsyncadd [#allocation9], %s60
      %s62 = sshll.u32 [#allocation8], 4
      %s63 = int_to_ptr.vmem [resolvable:$true] %s62
      %68 = dma.hbm_to_vmem [thread:$0]  %s5, 256, %s63, [#allocation9], 64, 64, 4
    $region25: #{tpu_custom_call.1} parent=1 // pred_fallthru
      _
    // Predicated region
    $region26: #{tpu_custom_call.1} parent=1 // pred_check
      _
    $region27: #{tpu_custom_call.1} parent=1 // pred_check_branch
      %70 = sbr.rel (0) target = $region29
    $region28: #{tpu_custom_call.1} parent=1 // pred_region
      _
    $region29: #{tpu_custom_call.1} parent=1 // pred_fallthru
      _
    // Predicated region
    $region30: #{tpu_custom_call.1} parent=1 // pred_check
      _
    $region31: #{tpu_custom_call.1} parent=1 // pred_check_branch
      %72 = sbr.rel (0) target = $region33
    $region32: #{tpu_custom_call.1} parent=1 // pred_region
      _
    $region33: #{tpu_custom_call.1} parent=1 // pred_fallthru
      _
    // Predicated region
    $region34: #{tpu_custom_call.1} parent=1 // pred_check
      _
    $region35: #{tpu_custom_call.1} parent=1 // pred_check_branch
      %74 = sbr.rel (0) target = $region37
    $region36: #{tpu_custom_call.1} parent=1 // pred_region
      %75 = dma.done [#allocation3], 1024
    $region37: #{tpu_custom_call.1} parent=1 // pred_fallthru
      _
    // Predicated region
    $region38: #{tpu_custom_call.1} parent=1 // pred_check
      _
    $region39: #{tpu_custom_call.1} parent=1 // pred_check_branch
      %77 = sbr.rel (0) target = $region41
    $region40: #{tpu_custom_call.1} parent=1 // pred_region
      %78 = dma.done [#allocation6], 1024
    $region41: #{tpu_custom_call.1} parent=1 // pred_fallthru
      _
    // Predicated region
    $region42: #{tpu_custom_call.1} parent=1 // pred_check
      _
    $region43: #{tpu_custom_call.1} parent=1 // pred_check_branch
      %80 = sbr.rel (0) target = $region45
    $region44: #{tpu_custom_call.1} parent=1 // pred_region
      %81 = dma.done [#allocation6], 1024
    $region45: #{tpu_custom_call.1} parent=1 // pred_fallthru
      _
    // Predicated region
    $region46: #{tpu_custom_call.1} parent=1 // pred_check
      _
    $region47: #{tpu_custom_call.1} parent=1 // pred_check_branch
      %83 = sbr.rel (0) target = $region49
    $region48: #{tpu_custom_call.1} parent=1 // pred_region
      %84 = dma.done [#allocation9], 256
    $region49: #{tpu_custom_call.1} parent=1 // pred_fallthru
      _
    %v86 = vld [vmem:[#allocation2] sm:$0xf]
    %v87 = vld [vmem:[#allocation2 + $0x4] sm:$0xf]
    %v88 = vld [vmem:[#allocation2 + $0x8] sm:$0xf]
    %v89 = vld [vmem:[#allocation2 + $0xc] sm:$0xf]
    %v90 = vld [vmem:[#allocation2 + $0x10] sm:$0xf]
    %v91 = vld [vmem:[#allocation2 + $0x14] sm:$0xf]
    %v92 = vld [vmem:[#allocation2 + $0x18] sm:$0xf]
    %v93 = vld [vmem:[#allocation2 + $0x1c] sm:$0xf]
    %v94 = vld [vmem:[#allocation2 + $0x20] sm:$0xf]
    %v95 = vld [vmem:[#allocation2 + $0x24] sm:$0xf]
    %v96 = vld [vmem:[#allocation2 + $0x28] sm:$0xf]
    %v97 = vld [vmem:[#allocation2 + $0x2c] sm:$0xf]
    %v98 = vld [vmem:[#allocation2 + $0x30] sm:$0xf]
    %v99 = vld [vmem:[#allocation2 + $0x34] sm:$0xf]
    %v100 = vld [vmem:[#allocation2 + $0x38] sm:$0xf]
    %v101 = vld [vmem:[#allocation2 + $0x3c] sm:$0xf]
    %v102 = vld [vmem:[#allocation5] sm:$0xf]
    %v103 = vld [vmem:[#allocation5 + $0x4] sm:$0xf]
    %v104 = vld [vmem:[#allocation5 + $0x8] sm:$0xf]
    %v105 = vld [vmem:[#allocation5 + $0xc] sm:$0xf]
    %v106 = vld [vmem:[#allocation5 + $0x10] sm:$0xf]
    %v107 = vld [vmem:[#allocation5 + $0x14] sm:$0xf]
    %v108 = vld [vmem:[#allocation5 + $0x18] sm:$0xf]
    %v109 = vld [vmem:[#allocation5 + $0x1c] sm:$0xf]
    %v110 = vld [vmem:[#allocation5 + $0x20] sm:$0xf]
    %v111 = vld [vmem:[#allocation5 + $0x24] sm:$0xf]
    %v112 = vld [vmem:[#allocation5 + $0x28] sm:$0xf]
    %v113 = vld [vmem:[#allocation5 + $0x2c] sm:$0xf]
    %v114 = vld [vmem:[#allocation5 + $0x30] sm:$0xf]
    %v115 = vld [vmem:[#allocation5 + $0x34] sm:$0xf]
    %v116 = vld [vmem:[#allocation5 + $0x38] sm:$0xf]
    %v117 = vld [vmem:[#allocation5 + $0x3c] sm:$0xf]
    %v118 = vld [vmem:[#allocation7] sm:$0xf]
    %v119 = vld [vmem:[#allocation7 + $0x4] sm:$0xf]
    %v120 = vld [vmem:[#allocation7 + $0x8] sm:$0xf]
    %v121 = vld [vmem:[#allocation7 + $0xc] sm:$0xf]
    %v122 = vld [vmem:[#allocation7 + $0x10] sm:$0xf]
    %v123 = vld [vmem:[#allocation7 + $0x14] sm:$0xf]
    %v124 = vld [vmem:[#allocation7 + $0x18] sm:$0xf]
    %v125 = vld [vmem:[#allocation7 + $0x1c] sm:$0xf]
    %v126 = vld [vmem:[#allocation7 + $0x20] sm:$0xf]
    %v127 = vld [vmem:[#allocation7 + $0x24] sm:$0xf]
    %v128 = vld [vmem:[#allocation7 + $0x28] sm:$0xf]
    %v129 = vld [vmem:[#allocation7 + $0x2c] sm:$0xf]
    %v130 = vld [vmem:[#allocation7 + $0x30] sm:$0xf]
    %v131 = vld [vmem:[#allocation7 + $0x34] sm:$0xf]
    %v132 = vld [vmem:[#allocation7 + $0x38] sm:$0xf]
    %v133 = vld [vmem:[#allocation7 + $0x3c] sm:$0xf]
    %v134 = vld [vmem:[%s3] sm:$0xf]
    %v135 = vld [vmem:[%s3 + $0x4] sm:$0xf]
    %v136 = vld [vmem:[%s3 + $0x8] sm:$0xf]
    %v137 = vld [vmem:[%s3 + $0xc] sm:$0xf]
    %v138 = vld [vmem:[%s4] sm:$0xf]
    %v139 = vld [vmem:[%s4 + $0x4] sm:$0xf]
    %v140 = vld [vmem:[%s4 + $0x8] sm:$0xf]
    %v141 = vld [vmem:[%s4 + $0xc] sm:$0xf]
    %v158 = vunpack.c.l.b16 %v102
    %v159 = vunpack.c.l.b16 %v103
    %v160 = vunpack.c.l.b16 %v104
    %v161 = vunpack.c.l.b16 %v105
    %v162 = vunpack.c.l.b16 %v106
    %v163 = vunpack.c.l.b16 %v107
    %v164 = vunpack.c.l.b16 %v108
    %v165 = vunpack.c.l.b16 %v109
    %v166 = vunpack.c.l.b16 %v110
    %v167 = vunpack.c.l.b16 %v111
    %v168 = vunpack.c.l.b16 %v112
    %v169 = vunpack.c.l.b16 %v113
    %v170 = vunpack.c.l.b16 %v114
    %v171 = vunpack.c.l.b16 %v115
    %v172 = vunpack.c.l.b16 %v116
    %v173 = vunpack.c.l.b16 %v117
    %v174 = vpack.c.b16 %v159, %v158
    %v175 = vpack.c.b16 %v161, %v160
    %v176 = vpack.c.b16 %v163, %v162
    %v177 = vpack.c.b16 %v165, %v164
    %v178 = vpack.c.b16 %v167, %v166
    %v179 = vpack.c.b16 %v169, %v168
    %v180 = vpack.c.b16 %v171, %v170
    %v181 = vpack.c.b16 %v173, %v172
    %v186 = vunpack.c.l.b16 %v138
    %v187 = vunpack.c.l.b16 %v139
    %v188 = vunpack.c.l.b16 %v140
    %v189 = vunpack.c.l.b16 %v141
    %v190 = vpack.c.b16 %v187, %v186
    %v191 = vpack.c.b16 %v189, %v188
    %vm194 = vcmask 261120
    %v196 = vsel %vm194, %v174, 0
    %v199 = vsel %vm194, %v175, 0
    %v202 = vsel %vm194, %v176, 0
    %v205 = vsel %vm194, %v177, 0
    %v208 = vsel %vm194, %v178, 0
    %v211 = vsel %vm194, %v179, 0
    %v214 = vsel %vm194, %v180, 0
    %v217 = vsel %vm194, %v181, 0
    %219 = vmatprep.subr.bf16.mxu0 0
    %220 = vmatpush1.bf16.msra.mxu0 %v190
    %221 = vmatprep.subr.bf16.mxu0 0
    %222 = vmatpush1.bf16.msra.mxu0 %v191
    %223 = vmatprep.subr.bf16.mxu0 0
    %224 = vmatpush1.bf16.msra.mxu0 0
    %225 = vmatprep.subr.bf16.mxu0 0
    %226 = vmatpush1.bf16.msra.mxu0 0
    %227 = vmatprep.subr.bf16.mxu0 0
    %228 = vmatpush1.bf16.msra.mxu0 0
    %229 = vmatprep.subr.bf16.mxu0 0
    %230 = vmatpush1.bf16.msra.mxu0 0
    %231 = vmatprep.subr.bf16.mxu0 0
    %232 = vmatpush1.bf16.msra.mxu0 0
    %233 = vmatprep.subr.bf16.mxu0 0
    %234 = vmatpush1.bf16.msra.mxu0 0
    %235 = vmatprep.subr.bf16.mxu0 0
    %236 = vmatpush1.bf16.msra.mxu0 0
    %237 = vmatprep.subr.bf16.mxu0 0
    %238 = vmatpush1.bf16.msra.mxu0 0
    %239 = vmatprep.subr.bf16.mxu0 0
    %240 = vmatpush1.bf16.msra.mxu0 0
    %241 = vmatprep.subr.bf16.mxu0 0
    %242 = vmatpush1.bf16.msra.mxu0 0
    %243 = vmatprep.subr.bf16.mxu0 0
    %244 = vmatpush1.bf16.msra.mxu0 0
    %245 = vmatprep.subr.bf16.mxu0 0
    %246 = vmatpush1.bf16.msra.mxu0 0
    %247 = vmatprep.subr.bf16.mxu0 0
    %248 = vmatpush1.bf16.msra.mxu0 0
    %249 = vmatprep.subr.bf16.mxu0 0
    %250 = vmatpush1.bf16.msra.mxu0 0
    %251 = vmatprep.mubr.bf16.mxu0 0
    %252 = vmatmul.mubr.bf16.gmra.mrb[0].mxu0 %v196
    %v253 = vpop.f32.mrb[0].mxu0
    %v254 = vadd.f32 0.0, %v253
    %v255 = vpop.f32.mrb[0].mxu0
    %v256 = vpop.f32.mrb[0].mxu0
    %v257 = vadd.f32 0.0, %v256
    %v258 = vpop.f32.mrb[0].mxu0
    %259 = vmatprep.mubr.bf16.mxu0 0
    %260 = vmatmul.mubr.bf16.gmra.mrb[0].mxu0 %v199
    %v261 = vpop.f32.mrb[0].mxu0
    %v262 = vadd.f32 0.0, %v261
    %v263 = vpop.f32.mrb[0].mxu0
    %v264 = vpop.f32.mrb[0].mxu0
    %v265 = vadd.f32 0.0, %v264
    %v266 = vpop.f32.mrb[0].mxu0
    %267 = vmatprep.mubr.bf16.mxu0 0
    %268 = vmatmul.mubr.bf16.gmra.mrb[0].mxu0 %v202
    %v269 = vpop.f32.mrb[0].mxu0
    %v270 = vadd.f32 0.0, %v269
    %v271 = vpop.f32.mrb[0].mxu0
    %v272 = vpop.f32.mrb[0].mxu0
    %v273 = vadd.f32 0.0, %v272
    %v274 = vpop.f32.mrb[0].mxu0
    %275 = vmatprep.mubr.bf16.mxu0 0
    %276 = vmatmul.mubr.bf16.gmra.mrb[0].mxu0 %v205
    %v277 = vpop.f32.mrb[0].mxu0
    %v278 = vadd.f32 0.0, %v277
    %v279 = vpop.f32.mrb[0].mxu0
    %v280 = vpop.f32.mrb[0].mxu0
    %v281 = vadd.f32 0.0, %v280
    %v282 = vpop.f32.mrb[0].mxu0
    %283 = vmatprep.mubr.bf16.mxu0 0
    %284 = vmatmul.mubr.bf16.gmra.mrb[0].mxu0 %v208
    %v285 = vpop.f32.mrb[0].mxu0
    %v286 = vadd.f32 0.0, %v285
    %v287 = vpop.f32.mrb[0].mxu0
    %v288 = vpop.f32.mrb[0].mxu0
    %v289 = vadd.f32 0.0, %v288
    %v290 = vpop.f32.mrb[0].mxu0
    %291 = vmatprep.mubr.bf16.mxu0 0
    %292 = vmatmul.mubr.bf16.gmra.mrb[0].mxu0 %v211
    %v293 = vpop.f32.mrb[0].mxu0
    %v294 = vadd.f32 0.0, %v293
    %v295 = vpop.f32.mrb[0].mxu0
    %v296 = vpop.f32.mrb[0].mxu0
    %v297 = vadd.f32 0.0, %v296
    %v298 = vpop.f32.mrb[0].mxu0
    %299 = vmatprep.mubr.bf16.mxu0 0
    %300 = vmatmul.mubr.bf16.gmra.mrb[0].mxu0 %v214
    %v301 = vpop.f32.mrb[0].mxu0
    %v302 = vadd.f32 0.0, %v301
    %v303 = vpop.f32.mrb[0].mxu0
    %v304 = vpop.f32.mrb[0].mxu0
    %v305 = vadd.f32 0.0, %v304
    %v306 = vpop.f32.mrb[0].mxu0
    %307 = vmatprep.mubr.bf16.mxu0 0
    %308 = vmatmul.mubr.bf16.gmra.mrb[0].mxu0 %v217
    %v309 = vpop.f32.mrb[0].mxu0
    %v310 = vadd.f32 0.0, %v309
    %v311 = vpop.f32.mrb[0].mxu0
    %v312 = vpop.f32.mrb[0].mxu0
    %v313 = vadd.f32 0.0, %v312
    %v314 = vpop.f32.mrb[0].mxu0
    %315 = vdwg.mxu0
    %v332 = vunpack.c.l.b16 %v86
    %v333 = vunpack.c.l.b16 %v87
    %v334 = vunpack.c.l.b16 %v88
    %v335 = vunpack.c.l.b16 %v89
    %v336 = vunpack.c.l.b16 %v90
    %v337 = vunpack.c.l.b16 %v91
    %v338 = vunpack.c.l.b16 %v92
    %v339 = vunpack.c.l.b16 %v93
    %v340 = vunpack.c.l.b16 %v94
    %v341 = vunpack.c.l.b16 %v95
    %v342 = vunpack.c.l.b16 %v96
    %v343 = vunpack.c.l.b16 %v97
    %v344 = vunpack.c.l.b16 %v98
    %v345 = vunpack.c.l.b16 %v99
    %v346 = vunpack.c.l.b16 %v100
    %v347 = vunpack.c.l.b16 %v101
    %v348 = vpack.c.b16 %v333, %v332
    %v349 = vpack.c.b16 %v335, %v334
    %v350 = vpack.c.b16 %v337, %v336
    %v351 = vpack.c.b16 %v339, %v338
    %v352 = vpack.c.b16 %v341, %v340
    %v353 = vpack.c.b16 %v343, %v342
    %v354 = vpack.c.b16 %v345, %v344
    %v355 = vpack.c.b16 %v347, %v346
    %v360 = vunpack.c.l.b16 %v134
    %v361 = vunpack.c.l.b16 %v135
    %v362 = vunpack.c.l.b16 %v136
    %v363 = vunpack.c.l.b16 %v137
    %v364 = vpack.c.b16 %v361, %v360
    %v365 = vpack.c.b16 %v363, %v362
    %v369 = vsel %vm194, %v348, 0
    %v372 = vsel %vm194, %v349, 0
    %v375 = vsel %vm194, %v350, 0
    %v378 = vsel %vm194, %v351, 0
    %v381 = vsel %vm194, %v352, 0
    %v384 = vsel %vm194, %v353, 0
    %v387 = vsel %vm194, %v354, 0
    %v390 = vsel %vm194, %v355, 0
    %392 = vmatprep.subr.bf16.mxu0 0
    %393 = vmatpush1.bf16.msra.mxu0 %v364
    %394 = vmatprep.subr.bf16.mxu0 0
    %395 = vmatpush1.bf16.msra.mxu0 %v365
    %396 = vmatprep.subr.bf16.mxu0 0
    %397 = vmatpush1.bf16.msra.mxu0 0
    %398 = vmatprep.subr.bf16.mxu0 0
    %399 = vmatpush1.bf16.msra.mxu0 0
    %400 = vmatprep.subr.bf16.mxu0 0
    %401 = vmatpush1.bf16.msra.mxu0 0
    %402 = vmatprep.subr.bf16.mxu0 0
    %403 = vmatpush1.bf16.msra.mxu0 0
    %404 = vmatprep.subr.bf16.mxu0 0
    %405 = vmatpush1.bf16.msra.mxu0 0
    %406 = vmatprep.subr.bf16.mxu0 0
    %407 = vmatpush1.bf16.msra.mxu0 0
    %408 = vmatprep.subr.bf16.mxu0 0
    %409 = vmatpush1.bf16.msra.mxu0 0
    %410 = vmatprep.subr.bf16.mxu0 0
    %411 = vmatpush1.bf16.msra.mxu0 0
    %412 = vmatprep.subr.bf16.mxu0 0
    %413 = vmatpush1.bf16.msra.mxu0 0
    %414 = vmatprep.subr.bf16.mxu0 0
    %415 = vmatpush1.bf16.msra.mxu0 0
    %416 = vmatprep.subr.bf16.mxu0 0
    %417 = vmatpush1.bf16.msra.mxu0 0
    %418 = vmatprep.subr.bf16.mxu0 0
    %419 = vmatpush1.bf16.msra.mxu0 0
    %420 = vmatprep.subr.bf16.mxu0 0
    %421 = vmatpush1.bf16.msra.mxu0 0
    %422 = vmatprep.subr.bf16.mxu0 0
    %423 = vmatpush1.bf16.msra.mxu0 0
    %424 = vmatprep.mubr.bf16.mxu0 0
    %425 = vmatmul.mubr.bf16.gmra.mrb[0].mxu0 %v369
    %v426 = vpop.f32.mrb[0].mxu0
    %v427 = vadd.f32 %v254, %v426
    %v428 = vpop.f32.mrb[0].mxu0
    %v429 = vpop.f32.mrb[0].mxu0
    %v430 = vadd.f32 %v257, %v429
    %v431 = vpop.f32.mrb[0].mxu0
    %432 = vmatprep.mubr.bf16.mxu0 0
    %433 = vmatmul.mubr.bf16.gmra.mrb[0].mxu0 %v372
    %v434 = vpop.f32.mrb[0].mxu0
    %v435 = vadd.f32 %v262, %v434
    %v436 = vpop.f32.mrb[0].mxu0
    %v437 = vpop.f32.mrb[0].mxu0
    %v438 = vadd.f32 %v265, %v437
    %v439 = vpop.f32.mrb[0].mxu0
    %440 = vmatprep.mubr.bf16.mxu0 0
    %441 = vmatmul.mubr.bf16.gmra.mrb[0].mxu0 %v375
    %v442 = vpop.f32.mrb[0].mxu0
    %v443 = vadd.f32 %v270, %v442
    %v444 = vpop.f32.mrb[0].mxu0
    %v445 = vpop.f32.mrb[0].mxu0
    %v446 = vadd.f32 %v273, %v445
    %v447 = vpop.f32.mrb[0].mxu0
    %448 = vmatprep.mubr.bf16.mxu0 0
    %449 = vmatmul.mubr.bf16.gmra.mrb[0].mxu0 %v378
    %v450 = vpop.f32.mrb[0].mxu0
    %v451 = vadd.f32 %v278, %v450
    %v452 = vpop.f32.mrb[0].mxu0
    %v453 = vpop.f32.mrb[0].mxu0
    %v454 = vadd.f32 %v281, %v453
    %v455 = vpop.f32.mrb[0].mxu0
    %456 = vmatprep.mubr.bf16.mxu0 0
    %457 = vmatmul.mubr.bf16.gmra.mrb[0].mxu0 %v381
    %v458 = vpop.f32.mrb[0].mxu0
    %v459 = vadd.f32 %v286, %v458
    %v460 = vpop.f32.mrb[0].mxu0
    %v461 = vpop.f32.mrb[0].mxu0
    %v462 = vadd.f32 %v289, %v461
    %v463 = vpop.f32.mrb[0].mxu0
    %464 = vmatprep.mubr.bf16.mxu0 0
    %465 = vmatmul.mubr.bf16.gmra.mrb[0].mxu0 %v384
    %v466 = vpop.f32.mrb[0].mxu0
    %v467 = vadd.f32 %v294, %v466
    %v468 = vpop.f32.mrb[0].mxu0
    %v469 = vpop.f32.mrb[0].mxu0
    %v470 = vadd.f32 %v297, %v469
    %v471 = vpop.f32.mrb[0].mxu0
    %472 = vmatprep.mubr.bf16.mxu0 0
    %473 = vmatmul.mubr.bf16.gmra.mrb[0].mxu0 %v387
    %v474 = vpop.f32.mrb[0].mxu0
    %v475 = vadd.f32 %v302, %v474
    %v476 = vpop.f32.mrb[0].mxu0
    %v477 = vpop.f32.mrb[0].mxu0
    %v478 = vadd.f32 %v305, %v477
    %v479 = vpop.f32.mrb[0].mxu0
    %480 = vmatprep.mubr.bf16.mxu0 0
    %481 = vmatmul.mubr.bf16.gmra.mrb[0].mxu0 %v390
    %v482 = vpop.f32.mrb[0].mxu0
    %v483 = vadd.f32 %v310, %v482
    %v484 = vpop.f32.mrb[0].mxu0
    %v485 = vpop.f32.mrb[0].mxu0
    %v486 = vadd.f32 %v313, %v485
    %v487 = vpop.f32.mrb[0].mxu0
    %488 = vdwg.mxu0
    %v489 = vld [vmem:[#allocation8] sm:$0xf]
    %v490 = vld [vmem:[#allocation8 + $0x4] sm:$0xf]
    %v491 = vld [vmem:[#allocation8 + $0x8] sm:$0xf]
    %v492 = vld [vmem:[#allocation8 + $0xc] sm:$0xf]
    %v509 = vunpack.c.l.b16 %v118
    %v510 = vunpack.c.l.b16 %v119
    %v511 = vunpack.c.l.b16 %v120
    %v512 = vunpack.c.l.b16 %v121
    %v513 = vunpack.c.l.b16 %v122
    %v514 = vunpack.c.l.b16 %v123
    %v515 = vunpack.c.l.b16 %v124
    %v516 = vunpack.c.l.b16 %v125
    %v517 = vunpack.c.l.b16 %v126
    %v518 = vunpack.c.l.b16 %v127
    %v519 = vunpack.c.l.b16 %v128
    %v520 = vunpack.c.l.b16 %v129
    %v521 = vunpack.c.l.b16 %v130
    %v522 = vunpack.c.l.b16 %v131
    %v523 = vunpack.c.l.b16 %v132
    %v524 = vunpack.c.l.b16 %v133
    %v525 = vpack.c.b16 %v510, %v509
    %v526 = vpack.c.b16 %v512, %v511
    %v527 = vpack.c.b16 %v514, %v513
    %v528 = vpack.c.b16 %v516, %v515
    %v529 = vpack.c.b16 %v518, %v517
    %v530 = vpack.c.b16 %v520, %v519
    %v531 = vpack.c.b16 %v522, %v521
    %v532 = vpack.c.b16 %v524, %v523
    %v537 = vunpack.c.l.b16 %v489
    %v538 = vunpack.c.l.b16 %v490
    %v539 = vunpack.c.l.b16 %v491
    %v540 = vunpack.c.l.b16 %v492
    %v541 = vpack.c.b16 %v538, %v537
    %v542 = vpack.c.b16 %v540, %v539
    %v546 = vsel %vm194, %v525, 0
    %v549 = vsel %vm194, %v526, 0
    %v552 = vsel %vm194, %v527, 0
    %v555 = vsel %vm194, %v528, 0
    %v558 = vsel %vm194, %v529, 0
    %v561 = vsel %vm194, %v530, 0
    %v564 = vsel %vm194, %v531, 0
    %v567 = vsel %vm194, %v532, 0
    %569 = vmatprep.subr.bf16.mxu0 0
    %570 = vmatpush1.bf16.msra.mxu0 %v541
    %571 = vmatprep.subr.bf16.mxu0 0
    %572 = vmatpush1.bf16.msra.mxu0 %v542
    %573 = vmatprep.subr.bf16.mxu0 0
    %574 = vmatpush1.bf16.msra.mxu0 0
    %575 = vmatprep.subr.bf16.mxu0 0
    %576 = vmatpush1.bf16.msra.mxu0 0
    %577 = vmatprep.subr.bf16.mxu0 0
    %578 = vmatpush1.bf16.msra.mxu0 0
    %579 = vmatprep.subr.bf16.mxu0 0
    %580 = vmatpush1.bf16.msra.mxu0 0
    %581 = vmatprep.subr.bf16.mxu0 0
    %582 = vmatpush1.bf16.msra.mxu0 0
    %583 = vmatprep.subr.bf16.mxu0 0
    %584 = vmatpush1.bf16.msra.mxu0 0
    %585 = vmatprep.subr.bf16.mxu0 0
    %586 = vmatpush1.bf16.msra.mxu0 0
    %587 = vmatprep.subr.bf16.mxu0 0
    %588 = vmatpush1.bf16.msra.mxu0 0
    %589 = vmatprep.subr.bf16.mxu0 0
    %590 = vmatpush1.bf16.msra.mxu0 0
    %591 = vmatprep.subr.bf16.mxu0 0
    %592 = vmatpush1.bf16.msra.mxu0 0
    %593 = vmatprep.subr.bf16.mxu0 0
    %594 = vmatpush1.bf16.msra.mxu0 0
    %595 = vmatprep.subr.bf16.mxu0 0
    %596 = vmatpush1.bf16.msra.mxu0 0
    %597 = vmatprep.subr.bf16.mxu0 0
    %598 = vmatpush1.bf16.msra.mxu0 0
    %599 = vmatprep.subr.bf16.mxu0 0
    %600 = vmatpush1.bf16.msra.mxu0 0
    %601 = vmatprep.mubr.bf16.mxu0 0
    %602 = vmatmul.mubr.bf16.gmra.mrb[0].mxu0 %v546
    %v603 = vpop.f32.mrb[0].mxu0
    %v604 = vadd.f32 0.0, %v603
    %v605 = vpop.f32.mrb[0].mxu0
    %v606 = vpop.f32.mrb[0].mxu0
    %v607 = vadd.f32 0.0, %v606
    %v608 = vpop.f32.mrb[0].mxu0
    %609 = vmatprep.mubr.bf16.mxu0 0
    %610 = vmatmul.mubr.bf16.gmra.mrb[0].mxu0 %v549
    %v611 = vpop.f32.mrb[0].mxu0
    %v612 = vadd.f32 0.0, %v611
    %v613 = vpop.f32.mrb[0].mxu0
    %v614 = vpop.f32.mrb[0].mxu0
    %v615 = vadd.f32 0.0, %v614
    %v616 = vpop.f32.mrb[0].mxu0
    %617 = vmatprep.mubr.bf16.mxu0 0
    %618 = vmatmul.mubr.bf16.gmra.mrb[0].mxu0 %v552
    %v619 = vpop.f32.mrb[0].mxu0
    %v620 = vadd.f32 0.0, %v619
    %v621 = vpop.f32.mrb[0].mxu0
    %v622 = vpop.f32.mrb[0].mxu0
    %v623 = vadd.f32 0.0, %v622
    %v624 = vpop.f32.mrb[0].mxu0
    %625 = vmatprep.mubr.bf16.mxu0 0
    %626 = vmatmul.mubr.bf16.gmra.mrb[0].mxu0 %v555
    %v627 = vpop.f32.mrb[0].mxu0
    %v628 = vadd.f32 0.0, %v627
    %v629 = vpop.f32.mrb[0].mxu0
    %v630 = vpop.f32.mrb[0].mxu0
    %v631 = vadd.f32 0.0, %v630
    %v632 = vpop.f32.mrb[0].mxu0
    %633 = vmatprep.mubr.bf16.mxu0 0
    %634 = vmatmul.mubr.bf16.gmra.mrb[0].mxu0 %v558
    %v635 = vpop.f32.mrb[0].mxu0
    %v636 = vadd.f32 0.0, %v635
    %v637 = vpop.f32.mrb[0].mxu0
    %v638 = vpop.f32.mrb[0].mxu0
    %v639 = vadd.f32 0.0, %v638
    %v640 = vpop.f32.mrb[0].mxu0
    %641 = vmatprep.mubr.bf16.mxu0 0
    %642 = vmatmul.mubr.bf16.gmra.mrb[0].mxu0 %v561
    %v643 = vpop.f32.mrb[0].mxu0
    %v644 = vadd.f32 0.0, %v643
    %v645 = vpop.f32.mrb[0].mxu0
    %v646 = vpop.f32.mrb[0].mxu0
    %v647 = vadd.f32 0.0, %v646
    %v648 = vpop.f32.mrb[0].mxu0
    %649 = vmatprep.mubr.bf16.mxu0 0
    %650 = vmatmul.mubr.bf16.gmra.mrb[0].mxu0 %v564
    %v651 = vpop.f32.mrb[0].mxu0
    %v652 = vadd.f32 0.0, %v651
    %v653 = vpop.f32.mrb[0].mxu0
    %v654 = vpop.f32.mrb[0].mxu0
    %v655 = vadd.f32 0.0, %v654
    %v656 = vpop.f32.mrb[0].mxu0
    %657 = vmatprep.mubr.bf16.mxu0 0
    %658 = vmatmul.mubr.bf16.gmra.mrb[0].mxu0 %v567
    %v659 = vpop.f32.mrb[0].mxu0
    %v660 = vadd.f32 0.0, %v659
    %v661 = vpop.f32.mrb[0].mxu0
    %v662 = vpop.f32.mrb[0].mxu0
    %v663 = vadd.f32 0.0, %v662
    %v664 = vpop.f32.mrb[0].mxu0
    %665 = vdwg.mxu0
    %v666 = vadd.f32 %v427, %v604
    %v667 = vadd.f32 %v430, %v607
    %v668 = vadd.f32 %v435, %v612
    %v669 = vadd.f32 %v438, %v615
    %v670 = vadd.f32 %v443, %v620
    %v671 = vadd.f32 %v446, %v623
    %v672 = vadd.f32 %v451, %v628
    %v673 = vadd.f32 %v454, %v631
    %v674 = vadd.f32 %v459, %v636
    %v675 = vadd.f32 %v462, %v639
    %v676 = vadd.f32 %v467, %v644
    %v677 = vadd.f32 %v470, %v647
    %v678 = vadd.f32 %v475, %v652
    %v679 = vadd.f32 %v478, %v655
    %v680 = vadd.f32 %v483, %v660
    %v681 = vadd.f32 %v486, %v663
    %v682 = vtanh.pop %v666
    %v683 = vtanh.pop %v667
    %v684 = vtanh.pop %v668
    %v685 = vtanh.pop %v669
    %v686 = vtanh.pop %v670
    %v687 = vtanh.pop %v671
    %v688 = vtanh.pop %v672
    %v689 = vtanh.pop %v673
    %v690 = vtanh.pop %v674
    %v691 = vtanh.pop %v675
    %v692 = vtanh.pop %v676
    %v693 = vtanh.pop %v677
    %v694 = vtanh.pop %v678
    %v695 = vtanh.pop %v679
    %v696 = vtanh.pop %v680
    %v697 = vtanh.pop %v681
    %v698 = vld [vmem:[%s6] sm:$0x1]
    %v700 = vlaneseq
    %v701 = vshrl.u32 %v700, 7
    %v702 = vsub.s32 0, %v701
    %v703 = vrot.slane %v698, %v702
    %v705 = vmul.f32 %v682, %v703
    %v706 = vmul.f32 %v683, %v703
    %v707 = vmul.f32 %v684, %v703
    %v708 = vmul.f32 %v685, %v703
    %v709 = vmul.f32 %v686, %v703
    %v710 = vmul.f32 %v687, %v703
    %v711 = vmul.f32 %v688, %v703
    %v712 = vmul.f32 %v689, %v703
    %v713 = vmul.f32 %v690, %v703
    %v714 = vmul.f32 %v691, %v703
    %v715 = vmul.f32 %v692, %v703
    %v716 = vmul.f32 %v693, %v703
    %v717 = vmul.f32 %v694, %v703
    %v718 = vmul.f32 %v695, %v703
    %v719 = vmul.f32 %v696, %v703
    %v720 = vmul.f32 %v697, %v703
    %721 = vadd.xlane.f32.xlu0 %v705
    %v722 = vpop.xlane.xlu0 %721
    %723 = vadd.xlane.f32.xlu0 %v706
    %v724 = vpop.xlane.xlu0 %723
    %725 = vadd.xlane.f32.xlu0 %v707
    %v726 = vpop.xlane.xlu0 %725
    %727 = vadd.xlane.f32.xlu0 %v708
    %v728 = vpop.xlane.xlu0 %727
    %729 = vadd.xlane.f32.xlu0 %v709
    %v730 = vpop.xlane.xlu0 %729
    %731 = vadd.xlane.f32.xlu0 %v710
    %v732 = vpop.xlane.xlu0 %731
    %733 = vadd.xlane.f32.xlu0 %v711
    %v734 = vpop.xlane.xlu0 %733
    %735 = vadd.xlane.f32.xlu0 %v712
    %v736 = vpop.xlane.xlu0 %735
    %737 = vadd.xlane.f32.xlu0 %v713
    %v738 = vpop.xlane.xlu0 %737
    %739 = vadd.xlane.f32.xlu0 %v714
    %v740 = vpop.xlane.xlu0 %739
    %741 = vadd.xlane.f32.xlu0 %v715
    %v742 = vpop.xlane.xlu0 %741
    %743 = vadd.xlane.f32.xlu0 %v716
    %v744 = vpop.xlane.xlu0 %743
    %745 = vadd.xlane.f32.xlu0 %v717
    %v746 = vpop.xlane.xlu0 %745
    %747 = vadd.xlane.f32.xlu0 %v718
    %v748 = vpop.xlane.xlu0 %747
    %749 = vadd.xlane.f32.xlu0 %v719
    %v750 = vpop.xlane.xlu0 %749
    %751 = vadd.xlane.f32.xlu0 %v720
    %v752 = vpop.xlane.xlu0 %751
    %v753 = vld [vmem:[%s7] sm:$0xff]
    %v754 = vld [vmem:[%s7 + $0x8] sm:$0xff]
    %v755 = vadd.f32 %v722, %v753
    %v756 = vadd.f32 %v724, %v754
    %v757 = vadd.f32 %v726, %v753
    %v758 = vadd.f32 %v728, %v754
    %v759 = vadd.f32 %v730, %v753
    %v760 = vadd.f32 %v732, %v754
    %v761 = vadd.f32 %v734, %v753
    %v762 = vadd.f32 %v736, %v754
    %v763 = vadd.f32 %v738, %v753
    %v764 = vadd.f32 %v740, %v754
    %v765 = vadd.f32 %v742, %v753
    %v766 = vadd.f32 %v744, %v754
    %v767 = vadd.f32 %v746, %v753
    %v768 = vadd.f32 %v748, %v754
    %v769 = vadd.f32 %v750, %v753
    %v770 = vadd.f32 %v752, %v754
    %vm771 = vcmask 7168
    %v772 = vsel %vm771, %v755, -inf
    %v773 = vsel %vm771, %v756, -inf
    %v774 = vmax.f32 %v772, %v773
    %v775 = vrot.slane %v774, 4
    %v776 = vmax.f32 %v774, %v775
    %v777 = vrot.slane %v776, 2
    %v778 = vmax.f32 %v776, %v777
    %v779 = vrot.slane %v778, 1
    %v780 = vmax.f32 %v778, %v779
    %v781 = vsel %vm771, %v757, -inf
    %v782 = vsel %vm771, %v758, -inf
    %v783 = vmax.f32 %v781, %v782
    %v784 = vrot.slane %v783, 4
    %v785 = vmax.f32 %v783, %v784
    %v786 = vrot.slane %v785, 2
    %v787 = vmax.f32 %v785, %v786
    %v788 = vrot.slane %v787, 1
    %v789 = vmax.f32 %v787, %v788
    %v790 = vsel %vm771, %v759, -inf
    %v791 = vsel %vm771, %v760, -inf
    %v792 = vmax.f32 %v790, %v791
    %v793 = vrot.slane %v792, 4
    %v794 = vmax.f32 %v792, %v793
    %v795 = vrot.slane %v794, 2
    %v796 = vmax.f32 %v794, %v795
    %v797 = vrot.slane %v796, 1
    %v798 = vmax.f32 %v796, %v797
    %v799 = vsel %vm771, %v761, -inf
    %v800 = vsel %vm771, %v762, -inf
    %v801 = vmax.f32 %v799, %v800
    %v802 = vrot.slane %v801, 4
    %v803 = vmax.f32 %v801, %v802
    %v804 = vrot.slane %v803, 2
    %v805 = vmax.f32 %v803, %v804
    %v806 = vrot.slane %v805, 1
    %v807 = vmax.f32 %v805, %v806
    %v808 = vsel %vm771, %v763, -inf
    %v809 = vsel %vm771, %v764, -inf
    %v810 = vmax.f32 %v808, %v809
    %v811 = vrot.slane %v810, 4
    %v812 = vmax.f32 %v810, %v811
    %v813 = vrot.slane %v812, 2
    %v814 = vmax.f32 %v812, %v813
    %v815 = vrot.slane %v814, 1
    %v816 = vmax.f32 %v814, %v815
    %v817 = vsel %vm771, %v765, -inf
    %v818 = vsel %vm771, %v766, -inf
    %v819 = vmax.f32 %v817, %v818
    %v820 = vrot.slane %v819, 4
    %v821 = vmax.f32 %v819, %v820
    %v822 = vrot.slane %v821, 2
    %v823 = vmax.f32 %v821, %v822
    %v824 = vrot.slane %v823, 1
    %v825 = vmax.f32 %v823, %v824
    %v826 = vsel %vm771, %v767, -inf
    %v827 = vsel %vm771, %v768, -inf
    %v828 = vmax.f32 %v826, %v827
    %v829 = vrot.slane %v828, 4
    %v830 = vmax.f32 %v828, %v829
    %v831 = vrot.slane %v830, 2
    %v832 = vmax.f32 %v830, %v831
    %v833 = vrot.slane %v832, 1
    %v834 = vmax.f32 %v832, %v833
    %v835 = vsel %vm771, %v769, -inf
    %v836 = vsel %vm771, %v770, -inf
    %v837 = vmax.f32 %v835, %v836
    %v838 = vrot.slane %v837, 4
    %v839 = vmax.f32 %v837, %v838
    %v840 = vrot.slane %v839, 2
    %v841 = vmax.f32 %v839, %v840
    %v842 = vrot.slane %v841, 1
    %v843 = vmax.f32 %v841, %v842
    %v844 = vsub.f32 %v755, %v780
    %v845 = vsub.f32 %v756, %v780
    %v846 = vsub.f32 %v757, %v789
    %v847 = vsub.f32 %v758, %v789
    %v848 = vsub.f32 %v759, %v798
    %v849 = vsub.f32 %v760, %v798
    %v850 = vsub.f32 %v761, %v807
    %v851 = vsub.f32 %v762, %v807
    %v852 = vsub.f32 %v763, %v816
    %v853 = vsub.f32 %v764, %v816
    %v854 = vsub.f32 %v765, %v825
    %v855 = vsub.f32 %v766, %v825
    %v856 = vsub.f32 %v767, %v834
    %v857 = vsub.f32 %v768, %v834
    %v858 = vsub.f32 %v769, %v843
    %v859 = vsub.f32 %v770, %v843
    %v860 = vmul.f32 %v844, 1.442695
    %v861 = vpow.pop %v860
    %v862 = vmul.f32 %v845, 1.442695
    %v863 = vpow.pop %v862
    %v864 = vmul.f32 %v846, 1.442695
    %v865 = vpow.pop %v864
    %v866 = vmul.f32 %v847, 1.442695
    %v867 = vpow.pop %v866
    %v868 = vmul.f32 %v848, 1.442695
    %v869 = vpow.pop %v868
    %v870 = vmul.f32 %v849, 1.442695
    %v871 = vpow.pop %v870
    %v872 = vmul.f32 %v850, 1.442695
    %v873 = vpow.pop %v872
    %v874 = vmul.f32 %v851, 1.442695
    %v875 = vpow.pop %v874
    %v876 = vmul.f32 %v852, 1.442695
    %v877 = vpow.pop %v876
    %v878 = vmul.f32 %v853, 1.442695
    %v879 = vpow.pop %v878
    %v880 = vmul.f32 %v854, 1.442695
    %v881 = vpow.pop %v880
    %v882 = vmul.f32 %v855, 1.442695
    %v883 = vpow.pop %v882
    %v884 = vmul.f32 %v856, 1.442695
    %v885 = vpow.pop %v884
    %v886 = vmul.f32 %v857, 1.442695
    %v887 = vpow.pop %v886
    %v888 = vmul.f32 %v858, 1.442695
    %v889 = vpow.pop %v888
    %v890 = vmul.f32 %v859, 1.442695
    %v891 = vpow.pop %v890
    %v892 = vsel %vm771, %v861, 0.0
    %v893 = vsel %vm771, %v863, 0.0
    %v894 = vadd.f32 %v892, %v893
    %v895 = vrot.slane %v894, 4
    %v896 = vadd.f32 %v894, %v895
    %v897 = vrot.slane %v896, 2
    %v898 = vadd.f32 %v896, %v897
    %v899 = vrot.slane %v898, 1
    %v900 = vadd.f32 %v898, %v899
    %v901 = vsel %vm771, %v865, 0.0
    %v902 = vsel %vm771, %v867, 0.0
    %v903 = vadd.f32 %v901, %v902
    %v904 = vrot.slane %v903, 4
    %v905 = vadd.f32 %v903, %v904
    %v906 = vrot.slane %v905, 2
    %v907 = vadd.f32 %v905, %v906
    %v908 = vrot.slane %v907, 1
    %v909 = vadd.f32 %v907, %v908
    %v910 = vsel %vm771, %v869, 0.0
    %v911 = vsel %vm771, %v871, 0.0
    %v912 = vadd.f32 %v910, %v911
    %v913 = vrot.slane %v912, 4
    %v914 = vadd.f32 %v912, %v913
    %v915 = vrot.slane %v914, 2
    %v916 = vadd.f32 %v914, %v915
    %v917 = vrot.slane %v916, 1
    %v918 = vadd.f32 %v916, %v917
    %v919 = vsel %vm771, %v873, 0.0
    %v920 = vsel %vm771, %v875, 0.0
    %v921 = vadd.f32 %v919, %v920
    %v922 = vrot.slane %v921, 4
    %v923 = vadd.f32 %v921, %v922
    %v924 = vrot.slane %v923, 2
    %v925 = vadd.f32 %v923, %v924
    %v926 = vrot.slane %v925, 1
    %v927 = vadd.f32 %v925, %v926
    %v928 = vsel %vm771, %v877, 0.0
    %v929 = vsel %vm771, %v879, 0.0
    %v930 = vadd.f32 %v928, %v929
    %v931 = vrot.slane %v930, 4
    %v932 = vadd.f32 %v930, %v931
    %v933 = vrot.slane %v932, 2
    %v934 = vadd.f32 %v932, %v933
    %v935 = vrot.slane %v934, 1
    %v936 = vadd.f32 %v934, %v935
    %v937 = vsel %vm771, %v881, 0.0
    %v938 = vsel %vm771, %v883, 0.0
    %v939 = vadd.f32 %v937, %v938
    %v940 = vrot.slane %v939, 4
    %v941 = vadd.f32 %v939, %v940
    %v942 = vrot.slane %v941, 2
    %v943 = vadd.f32 %v941, %v942
    %v944 = vrot.slane %v943, 1
    %v945 = vadd.f32 %v943, %v944
    %v946 = vsel %vm771, %v885, 0.0
    %v947 = vsel %vm771, %v887, 0.0
    %v948 = vadd.f32 %v946, %v947
    %v949 = vrot.slane %v948, 4
    %v950 = vadd.f32 %v948, %v949
    %v951 = vrot.slane %v950, 2
    %v952 = vadd.f32 %v950, %v951
    %v953 = vrot.slane %v952, 1
    %v954 = vadd.f32 %v952, %v953
    %v955 = vsel %vm771, %v889, 0.0
    %v956 = vsel %vm771, %v891, 0.0
    %v957 = vadd.f32 %v955, %v956
    %v958 = vrot.slane %v957, 4
    %v959 = vadd.f32 %v957, %v958
    %v960 = vrot.slane %v959, 2
    %v961 = vadd.f32 %v959, %v960
    %v962 = vrot.slane %v961, 1
    %v963 = vadd.f32 %v961, %v962
    %v964 = vrcp.pop %v900
    %v965 = vrcp.pop %v909
    %v966 = vrcp.pop %v918
    %v967 = vrcp.pop %v927
    %v968 = vrcp.pop %v936
    %v969 = vrcp.pop %v945
    %v970 = vrcp.pop %v954
    %v971 = vrcp.pop %v963
    %v972 = vmul.f32 %v861, %v964
    %v973 = vmul.f32 %v863, %v964
    %v974 = vmul.f32 %v865, %v965
    %v975 = vmul.f32 %v867, %v965
    %v976 = vmul.f32 %v869, %v966
    %v977 = vmul.f32 %v871, %v966
    %v978 = vmul.f32 %v873, %v967
    %v979 = vmul.f32 %v875, %v967
    %v980 = vmul.f32 %v877, %v968
    %v981 = vmul.f32 %v879, %v968
    %v982 = vmul.f32 %v881, %v969
    %v983 = vmul.f32 %v883, %v969
    %v984 = vmul.f32 %v885, %v970
    %v985 = vmul.f32 %v887, %v970
    %v986 = vmul.f32 %v889, %v971
    %v987 = vmul.f32 %v891, %v971
    %989 = vset.pattern.permute.xlu0 0
    %990 = vperm.xlu0 %989, %v972
    %v991 = vpop.permute.xlu0 %990
    %994 = vset.pattern.permute.xlu0 0
    %995 = vperm.xlu0 %994, %v973
    %v996 = vpop.permute.xlu0 %995
    %999 = vset.pattern.permute.xlu0 0
    %1000 = vperm.xlu0 %999, %v974
    %v1001 = vpop.permute.xlu0 %1000
    %1004 = vset.pattern.permute.xlu0 0
    %1005 = vperm.xlu0 %1004, %v975
    %v1006 = vpop.permute.xlu0 %1005
    %1009 = vset.pattern.permute.xlu0 0
    %1010 = vperm.xlu0 %1009, %v976
    %v1011 = vpop.permute.xlu0 %1010
    %1014 = vset.pattern.permute.xlu0 0
    %1015 = vperm.xlu0 %1014, %v977
    %v1016 = vpop.permute.xlu0 %1015
    %1019 = vset.pattern.permute.xlu0 0
    %1020 = vperm.xlu0 %1019, %v978
    %v1021 = vpop.permute.xlu0 %1020
    %1024 = vset.pattern.permute.xlu0 0
    %1025 = vperm.xlu0 %1024, %v979
    %v1026 = vpop.permute.xlu0 %1025
    %1029 = vset.pattern.permute.xlu0 0
    %1030 = vperm.xlu0 %1029, %v980
    %v1031 = vpop.permute.xlu0 %1030
    %1034 = vset.pattern.permute.xlu0 0
    %1035 = vperm.xlu0 %1034, %v981
    %v1036 = vpop.permute.xlu0 %1035
    %1039 = vset.pattern.permute.xlu0 0
    %1040 = vperm.xlu0 %1039, %v982
    %v1041 = vpop.permute.xlu0 %1040
    %1044 = vset.pattern.permute.xlu0 0
    %1045 = vperm.xlu0 %1044, %v983
    %v1046 = vpop.permute.xlu0 %1045
    %1049 = vset.pattern.permute.xlu0 0
    %1050 = vperm.xlu0 %1049, %v984
    %v1051 = vpop.permute.xlu0 %1050
    %1054 = vset.pattern.permute.xlu0 0
    %1055 = vperm.xlu0 %1054, %v985
    %v1056 = vpop.permute.xlu0 %1055
    %1059 = vset.pattern.permute.xlu0 0
    %1060 = vperm.xlu0 %1059, %v986
    %v1061 = vpop.permute.xlu0 %1060
    %1064 = vset.pattern.permute.xlu0 0
    %1065 = vperm.xlu0 %1064, %v987
    %v1066 = vpop.permute.xlu0 %1065
    %v1068 = vmul.f32 %v682, %v991
    %v1069 = vmul.f32 %v683, %v996
    %v1070 = vmul.f32 %v684, %v1001
    %v1071 = vmul.f32 %v685, %v1006
    %v1072 = vmul.f32 %v686, %v1011
    %v1073 = vmul.f32 %v687, %v1016
    %v1074 = vmul.f32 %v688, %v1021
    %v1075 = vmul.f32 %v689, %v1026
    %v1076 = vmul.f32 %v690, %v1031
    %v1077 = vmul.f32 %v691, %v1036
    %v1078 = vmul.f32 %v692, %v1041
    %v1079 = vmul.f32 %v693, %v1046
    %v1080 = vmul.f32 %v694, %v1051
    %v1081 = vmul.f32 %v695, %v1056
    %v1082 = vmul.f32 %v696, %v1061
    %v1083 = vmul.f32 %v697, %v1066
    %v1084 = vadd.f32 %v1068, %v1069
    %v1085 = vrot.slane %v1084, 4
    %v1086 = vadd.f32 %v1084, %v1085
    %v1087 = vrot.slane %v1086, 2
    %v1088 = vadd.f32 %v1086, %v1087
    %v1089 = vrot.slane %v1088, 1
    %v1090 = vadd.f32 %v1088, %v1089
    %v1091 = vadd.f32 %v1070, %v1071
    %v1092 = vrot.slane %v1091, 4
    %v1093 = vadd.f32 %v1091, %v1092
    %v1094 = vrot.slane %v1093, 2
    %v1095 = vadd.f32 %v1093, %v1094
    %v1096 = vrot.slane %v1095, 1
    %v1097 = vadd.f32 %v1095, %v1096
    %v1098 = vadd.f32 %v1072, %v1073
    %v1099 = vrot.slane %v1098, 4
    %v1100 = vadd.f32 %v1098, %v1099
    %v1101 = vrot.slane %v1100, 2
    %v1102 = vadd.f32 %v1100, %v1101
    %v1103 = vrot.slane %v1102, 1
    %v1104 = vadd.f32 %v1102, %v1103
    %v1105 = vadd.f32 %v1074, %v1075
    %v1106 = vrot.slane %v1105, 4
    %v1107 = vadd.f32 %v1105, %v1106
    %v1108 = vrot.slane %v1107, 2
    %v1109 = vadd.f32 %v1107, %v1108
    %v1110 = vrot.slane %v1109, 1
    %v1111 = vadd.f32 %v1109, %v1110
    %v1112 = vadd.f32 %v1076, %v1077
    %v1113 = vrot.slane %v1112, 4
    %v1114 = vadd.f32 %v1112, %v1113
    %v1115 = vrot.slane %v1114, 2
    %v1116 = vadd.f32 %v1114, %v1115
    %v1117 = vrot.slane %v1116, 1
    %v1118 = vadd.f32 %v1116, %v1117
    %v1119 = vadd.f32 %v1078, %v1079
    %v1120 = vrot.slane %v1119, 4
    %v1121 = vadd.f32 %v1119, %v1120
    %v1122 = vrot.slane %v1121, 2
    %v1123 = vadd.f32 %v1121, %v1122
    %v1124 = vrot.slane %v1123, 1
    %v1125 = vadd.f32 %v1123, %v1124
    %v1126 = vadd.f32 %v1080, %v1081
    %v1127 = vrot.slane %v1126, 4
    %v1128 = vadd.f32 %v1126, %v1127
    %v1129 = vrot.slane %v1128, 2
    %v1130 = vadd.f32 %v1128, %v1129
    %v1131 = vrot.slane %v1130, 1
    %v1132 = vadd.f32 %v1130, %v1131
    %v1133 = vadd.f32 %v1082, %v1083
    %v1134 = vrot.slane %v1133, 4
    %v1135 = vadd.f32 %v1133, %v1134
    %v1136 = vrot.slane %v1135, 2
    %v1137 = vadd.f32 %v1135, %v1136
    %v1138 = vrot.slane %v1137, 1
    %v1139 = vadd.f32 %v1137, %v1138
    %vm1148 = vcmask 1041409
    %v1149 = vsel %vm1148, %v1097, %v1090
    %vm1150 = vcmask 1042434
    %v1151 = vsel %vm1150, %v1104, %v1149
    %vm1152 = vcmask 1043459
    %v1153 = vsel %vm1152, %v1111, %v1151
    %vm1154 = vcmask 1044484
    %v1155 = vsel %vm1154, %v1118, %v1153
    %vm1156 = vcmask 1045509
    %v1157 = vsel %vm1156, %v1125, %v1155
    %vm1158 = vcmask 1046534
    %v1159 = vsel %vm1158, %v1132, %v1157
    %vm1160 = vcmask 1047559
    %v1161 = vsel %vm1160, %v1139, %v1159
    %1163 = vst [vmem:[#allocation10] sm:$0xff] %v1161
    // Predicated region
    $region50: #{tpu_custom_call.1} parent=1 // pred_check
      _
    $region51: #{tpu_custom_call.1} parent=1 // pred_check_branch
      %1165 = sbr.rel (0) target = $region53
    $region52: #{tpu_custom_call.1} parent=1 // pred_region
      %s1167 = ssub.s32 128, 128
      %1168 = vsyncadd [#allocation4], %s1167
      %s1170 = sshll.u32 [#allocation10], 4
      %s1171 = int_to_ptr.vmem [resolvable:$true] %s1170
      %1173 = dma.vmem_to_hbm [thread:$0]  %s1171, 128, %s8, [#allocation4]
    $region53: #{tpu_custom_call.1} parent=1 // pred_fallthru
      _
    // Predicated region
    $region54: #{tpu_custom_call.1} parent=1 // pred_check
      _
    $region55: #{tpu_custom_call.1} parent=1 // pred_check_branch
      %1175 = sbr.rel (0) target = $region57
    $region56: #{tpu_custom_call.1} parent=1 // pred_region
      %1176 = dma.done [#allocation4], 128
    $region57: #{tpu_custom_call.1} parent=1 // pred_fallthru
      _
    %1177 = vsyncpa [#allocation3], 1
    %1178 = vsyncpa [#allocation6], 1
    %1179 = vsyncpa [#allocation9], 1
    %1180 = vsyncpa [#allocation4], 1

</llo_original>
